<compile_context>
chip_gen: v7x
topology: tpu7x:2x2x1
jax: 0.10.0
libtpu: 0.0.40
codegen_flags: <defaults>
</compile_context>

<pallas_src>
import jax
import jax.numpy as jnp
from jax.experimental import pallas as pl
from jax.experimental.pallas import tpu as pltpu


def _make_fused_mlp_kernel(n_layers):
    """Kernel signature: (x_ref, w1, b1, ..., wN, bN, o_ref)."""

    def kernel(*refs):
        x_ref = refs[0]
        o_ref = refs[-1]
        h = x_ref[...].astype(jnp.float32)            # (Din, TB), batch on lanes
        for i in range(n_layers):
            w = refs[1 + 2 * i][...]                  # (Dout_i, Din_i)
            b = refs[2 + 2 * i][...]                  # (Dout_i, 1)
            h = jnp.dot(w, h, preferred_element_type=jnp.float32) + b
            if i != n_layers - 1:                     # no activation after last layer
                h = jnp.tanh(h)
        o_ref[...] = h.astype(o_ref.dtype)

    return kernel


def net_forward(x, params, *, max_tile_b=4096):
    """Forward pass of Net (Linear -> tanh repeated, no tanh after last layer).

    x:      [B, Din]   (PyTorch layout)
    params: list of (w, b) with w of shape [out, in] (PyTorch layout), b [out]
    returns [B, Dout_last]
    """
    B, Din = x.shape
    n_layers = len(params)
    Dout = params[-1][0].shape[0]

    # Lane-dense internal layout: batch on the last (lane) axis.
    xt = x.T                                          # [Din, B]

    # Batch tiling: one grid step for small batches; big lane-aligned tiles
    # (>= 2 "parallel" steps -> feeds both v7x TensorCores) for large batches.
    if B <= max_tile_b:
        tile_b, b_pad = B, B
    else:
        tile_b = max_tile_b                           # multiple of 128
        b_pad = pl.cdiv(B, tile_b) * tile_b
        if b_pad != B:
            xt = jnp.pad(xt, ((0, 0), (0, b_pad - B)))

    flat_params = []
    in_specs = [pl.BlockSpec((Din, tile_b), lambda i: (0, i))]
    for w, b in params:
        out_d, in_d = w.shape
        flat_params.append(w)
        flat_params.append(b.reshape(out_d, 1))
        # Weights/biases fully VMEM-resident across the batch grid.
        in_specs.append(pl.BlockSpec((out_d, in_d), lambda i: (0, 0)))
        in_specs.append(pl.BlockSpec((out_d, 1), lambda i: (0, 0)))

    out_t = pl.pallas_call(
        _make_fused_mlp_kernel(n_layers),
        out_shape=jax.ShapeDtypeStruct((Dout, b_pad), x.dtype),
        grid_spec=pltpu.PrefetchScalarGridSpec(
            num_scalar_prefetch=0,
            grid=(b_pad // tile_b,),
            in_specs=in_specs,
            out_specs=pl.BlockSpec((Dout, tile_b), lambda i: (0, i)),
        ),
        compiler_params=pltpu.CompilerParams(
            dimension_semantics=("parallel",)),
    )(xt, *flat_params)

    return out_t[:, :B].T                             # back to [B, Dout]


def init_params(seq_net, key):
    """Mirror Net.__init__: nn.Linear(in, out, bias=True), bias forced to 0.

    Weights are stored in PyTorch's native [out, in] layout; deterministic
    uniform draw with the same fan-in bound as PyTorch's default init.
    """
    params = []
    for i in range(len(seq_net) - 1):
        fan_in, fan_out = seq_net[i], seq_net[i + 1]
        key, sub = jax.random.split(key)
        bound = 1.0 / jnp.sqrt(fan_in)
        w = jax.random.uniform(
            sub, (fan_out, fan_in), minval=-bound, maxval=bound,
            dtype=jnp.float32)
        b = jnp.zeros((fan_out,), dtype=jnp.float32)
        params.append((w, b))
    return params


def net_forward_ref(x, params):
    """Pure-JAX reference matching the PyTorch forward exactly."""
    n_layers = len(params)
    for i, (w, b) in enumerate(params):
        x = x @ w.T + b
        if i != n_layers - 1:
            x = jnp.tanh(x)
    return x


if __name__ == "__main__":
    # Typical PINN MLP: 2 input coords -> hidden 32 x3 -> 1 output.
    seq_net = [2, 32, 32, 32, 1]
    batch = 128

    key = jax.random.PRNGKey(0)
    key, xk = jax.random.split(key)
    params = init_params(seq_net, key)

    x = jax.random.normal(xk, (batch, seq_net[0]), dtype=jnp.float32)
    out = jax.block_until_ready(net_forward(x, params))
    ref = net_forward_ref(x, params)
    assert out.shape == (batch, seq_net[-1])
    assert jnp.allclose(out, ref, atol=1e-5, rtol=1e-5), "mismatch vs reference"

    # Non-128-divisible batch: the old hard divisibility assert is gone.
    x2 = jax.random.normal(jax.random.PRNGKey(1), (100, seq_net[0]),
                           dtype=jnp.float32)
    out2 = jax.block_until_ready(net_forward(x2, params))
    ref2 = net_forward_ref(x2, params)
    assert out2.shape == (100, seq_net[-1])
    assert jnp.allclose(out2, ref2, atol=1e-5, rtol=1e-5), "tail mismatch"

    print("KERNEL_OK")
</pallas_src>

<mosaic_0001>
module attributes {stable_mosaic.version = 11 : i64} {
  func.func @kernel(%arg0: i32, %arg1: memref<2x128xf32, #tpu.memory_space<vmem>>, %arg2: memref<32x2xf32, #tpu.memory_space<vmem>>, %arg3: memref<32x1xf32, #tpu.memory_space<vmem>>, %arg4: memref<32x32xf32, #tpu.memory_space<vmem>>, %arg5: memref<32x1xf32, #tpu.memory_space<vmem>>, %arg6: memref<32x32xf32, #tpu.memory_space<vmem>>, %arg7: memref<32x1xf32, #tpu.memory_space<vmem>>, %arg8: memref<1x32xf32, #tpu.memory_space<vmem>>, %arg9: memref<1x1xf32, #tpu.memory_space<vmem>>, %arg10: memref<1x128xf32, #tpu.memory_space<vmem>>) attributes {dimension_semantics = [#tpu.dimension_semantics<parallel>], iteration_bounds = array<i64: 1>, scalar_prefetch = 0 : i64, scratch_operands = 0 : i64, tpu.core_type = #tpu.core_type<tc>, window_params = [{transform_indices = @transform_0, window_bounds = array<i64: 2, 128>}, {pipeline_mode = #tpu.pipeline_mode<synchronous>, transform_indices = @transform_1, window_bounds = array<i64: 32, 2>}, {pipeline_mode = #tpu.pipeline_mode<synchronous>, transform_indices = @transform_2, window_bounds = array<i64: 32, 1>}, {pipeline_mode = #tpu.pipeline_mode<synchronous>, transform_indices = @transform_3, window_bounds = array<i64: 32, 32>}, {pipeline_mode = #tpu.pipeline_mode<synchronous>, transform_indices = @transform_4, window_bounds = array<i64: 32, 1>}, {pipeline_mode = #tpu.pipeline_mode<synchronous>, transform_indices = @transform_5, window_bounds = array<i64: 32, 32>}, {pipeline_mode = #tpu.pipeline_mode<synchronous>, transform_indices = @transform_6, window_bounds = array<i64: 32, 1>}, {pipeline_mode = #tpu.pipeline_mode<synchronous>, transform_indices = @transform_7, window_bounds = array<i64: 1, 32>}, {pipeline_mode = #tpu.pipeline_mode<synchronous>, transform_indices = @transform_8, window_bounds = array<i64: 1, 1>}, {transform_indices = @transform_9, window_bounds = array<i64: 1, 128>}]} {
    %c0 = arith.constant 0 : index
    %c0_0 = arith.constant 0 : index
    %0 = vector.load %arg1[%c0, %c0_0] : memref<2x128xf32, #tpu.memory_space<vmem>>, vector<2x128xf32>
    %c0_1 = arith.constant 0 : index
    %c0_2 = arith.constant 0 : index
    %1 = vector.load %arg2[%c0_1, %c0_2] : memref<32x2xf32, #tpu.memory_space<vmem>>, vector<32x2xf32>
    %c0_3 = arith.constant 0 : index
    %c0_4 = arith.constant 0 : index
    %2 = vector.load %arg3[%c0_3, %c0_4] : memref<32x1xf32, #tpu.memory_space<vmem>>, vector<32x1xf32>
    %cst = arith.constant dense<0.000000e+00> : vector<32x128xf32>
    %3 = tpu.matmul %1, %0, %cst {dimension_numbers = #tpu.dot_dimension_numbers<[1], [0], [0], [1], [0, 0, 1, 1], [], []>} : vector<32x2xf32>, vector<2x128xf32>, vector<32x128xf32> -> vector<32x128xf32>
    %4 = vector.broadcast %2 : vector<32x1xf32> to vector<32x128xf32>
    %5 = arith.addf %3, %4 : vector<32x128xf32>
    %6 = math.tanh %5 : vector<32x128xf32>
    %c0_5 = arith.constant 0 : index
    %c0_6 = arith.constant 0 : index
    %7 = vector.load %arg4[%c0_5, %c0_6] : memref<32x32xf32, #tpu.memory_space<vmem>>, vector<32x32xf32>
    %c0_7 = arith.constant 0 : index
    %c0_8 = arith.constant 0 : index
    %8 = vector.load %arg5[%c0_7, %c0_8] : memref<32x1xf32, #tpu.memory_space<vmem>>, vector<32x1xf32>
    %cst_9 = arith.constant dense<0.000000e+00> : vector<32x128xf32>
    %9 = tpu.matmul %7, %6, %cst_9 {dimension_numbers = #tpu.dot_dimension_numbers<[1], [0], [0], [1], [0, 0, 1, 1], [], []>} : vector<32x32xf32>, vector<32x128xf32>, vector<32x128xf32> -> vector<32x128xf32>
    %10 = vector.broadcast %8 : vector<32x1xf32> to vector<32x128xf32>
    %11 = arith.addf %9, %10 : vector<32x128xf32>
    %12 = math.tanh %11 : vector<32x128xf32>
    %c0_10 = arith.constant 0 : index
    %c0_11 = arith.constant 0 : index
    %13 = vector.load %arg6[%c0_10, %c0_11] : memref<32x32xf32, #tpu.memory_space<vmem>>, vector<32x32xf32>
    %c0_12 = arith.constant 0 : index
    %c0_13 = arith.constant 0 : index
    %14 = vector.load %arg7[%c0_12, %c0_13] : memref<32x1xf32, #tpu.memory_space<vmem>>, vector<32x1xf32>
    %cst_14 = arith.constant dense<0.000000e+00> : vector<32x128xf32>
    %15 = tpu.matmul %13, %12, %cst_14 {dimension_numbers = #tpu.dot_dimension_numbers<[1], [0], [0], [1], [0, 0, 1, 1], [], []>} : vector<32x32xf32>, vector<32x128xf32>, vector<32x128xf32> -> vector<32x128xf32>
    %16 = vector.broadcast %14 : vector<32x1xf32> to vector<32x128xf32>
    %17 = arith.addf %15, %16 : vector<32x128xf32>
    %18 = math.tanh %17 : vector<32x128xf32>
    %c0_15 = arith.constant 0 : index
    %c0_16 = arith.constant 0 : index
    %19 = vector.load %arg8[%c0_15, %c0_16] : memref<1x32xf32, #tpu.memory_space<vmem>>, vector<1x32xf32>
    %c0_17 = arith.constant 0 : index
    %c0_18 = arith.constant 0 : index
    %20 = vector.load %arg9[%c0_17, %c0_18] : memref<1x1xf32, #tpu.memory_space<vmem>>, vector<1x1xf32>
    %cst_19 = arith.constant dense<0.000000e+00> : vector<1x128xf32>
    %21 = tpu.matmul %19, %18, %cst_19 {dimension_numbers = #tpu.dot_dimension_numbers<[1], [0], [0], [1], [0, 0, 1, 1], [], []>} : vector<1x32xf32>, vector<32x128xf32>, vector<1x128xf32> -> vector<1x128xf32>
    %22 = vector.broadcast %20 : vector<1x1xf32> to vector<1x128xf32>
    %23 = arith.addf %21, %22 : vector<1x128xf32>
    %c0_20 = arith.constant 0 : index
    %c0_21 = arith.constant 0 : index
    %24 = vector.load %arg10[%c0_20, %c0_21] : memref<1x128xf32, #tpu.memory_space<vmem>>, vector<1x128xf32>
    tpu.vector_store %arg10[%c0_20, %c0_21], %23 {strides = array<i32>} : memref<1x128xf32, #tpu.memory_space<vmem>>, vector<1x128xf32>,
    return
  }
  func.func @transform_0(%arg0: i32) -> (i32, i32) {
    %c0_i32 = arith.constant 0 : i32
    %c0_i32_0 = arith.constant 0 : i32
    return %c0_i32, %arg0 : i32, i32
  }
  func.func @transform_1(%arg0: i32) -> (i32, i32) {
    %c0_i32 = arith.constant 0 : i32
    %c0_i32_0 = arith.constant 0 : i32
    %c0_i32_1 = arith.constant 0 : i32
    return %c0_i32, %c0_i32_0 : i32, i32
  }
  func.func @transform_2(%arg0: i32) -> (i32, i32) {
    %c0_i32 = arith.constant 0 : i32
    %c0_i32_0 = arith.constant 0 : i32
    %c0_i32_1 = arith.constant 0 : i32
    return %c0_i32, %c0_i32_0 : i32, i32
  }
  func.func @transform_3(%arg0: i32) -> (i32, i32) {
    %c0_i32 = arith.constant 0 : i32
    %c0_i32_0 = arith.constant 0 : i32
    %c0_i32_1 = arith.constant 0 : i32
    return %c0_i32, %c0_i32_0 : i32, i32
  }
  func.func @transform_4(%arg0: i32) -> (i32, i32) {
    %c0_i32 = arith.constant 0 : i32
    %c0_i32_0 = arith.constant 0 : i32
    %c0_i32_1 = arith.constant 0 : i32
    return %c0_i32, %c0_i32_0 : i32, i32
  }
  func.func @transform_5(%arg0: i32) -> (i32, i32) {
    %c0_i32 = arith.constant 0 : i32
    %c0_i32_0 = arith.constant 0 : i32
    %c0_i32_1 = arith.constant 0 : i32
    return %c0_i32, %c0_i32_0 : i32, i32
  }
  func.func @transform_6(%arg0: i32) -> (i32, i32) {
    %c0_i32 = arith.constant 0 : i32
    %c0_i32_0 = arith.constant 0 : i32
    %c0_i32_1 = arith.constant 0 : i32
    return %c0_i32, %c0_i32_0 : i32, i32
  }
  func.func @transform_7(%arg0: i32) -> (i32, i32) {
    %c0_i32 = arith.constant 0 : i32
    %c0_i32_0 = arith.constant 0 : i32
    %c0_i32_1 = arith.constant 0 : i32
    return %c0_i32, %c0_i32_0 : i32, i32
  }
  func.func @transform_8(%arg0: i32) -> (i32, i32) {
    %c0_i32 = arith.constant 0 : i32
    %c0_i32_0 = arith.constant 0 : i32
    %c0_i32_1 = arith.constant 0 : i32
    return %c0_i32, %c0_i32_0 : i32, i32
  }
  func.func @transform_9(%arg0: i32) -> (i32, i32) {
    %c0_i32 = arith.constant 0 : i32
    %c0_i32_0 = arith.constant 0 : i32
    return %c0_i32, %arg0 : i32, i32
  }
}

</mosaic_0001>

<llo_original>
// kernel: tpu_custom_call.1
$region0: #{tpu_custom_call.1}
  #allocation0 [shape = 'u32[]', space=smem, size = 0x4, offset = 0x4, fixed_abs, tag = 'smem constant byte address 0x4 - core index']
  #allocation1 [shape = 'u32[144,128]{1,0:T(1,128)}', space=vmem, size = 0x12000, scoped, tag = 'internal scratch']
  #allocation2 [shape = 'f32[1,1]{1,0:T(1,128)S(1)}', space=vmem, size = 0x200, scoped, tag = 'scoped memory for tpu_custom_call.1']
  %s0 = inlined_call_operand.vmem [shape: f32[2,128], index: 0, kind: input, shape index: {}]
  %s1 = inlined_call_operand.vmem [shape: f32[32,2], index: 1, kind: input, shape index: {}]
  %s2 = inlined_call_operand.vmem [shape: f32[32,1], index: 2, kind: input, shape index: {}]
  %s3 = inlined_call_operand.vmem [shape: f32[32,32], index: 3, kind: input, shape index: {}]
  %s4 = inlined_call_operand.vmem [shape: f32[32,1], index: 4, kind: input, shape index: {}]
  %s5 = inlined_call_operand.vmem [shape: f32[32,32], index: 5, kind: input, shape index: {}]
  %s6 = inlined_call_operand.vmem [shape: f32[32,1], index: 6, kind: input, shape index: {}]
  %s7 = inlined_call_operand.vmem [shape: f32[1,32], index: 7, kind: input, shape index: {}]
  %s8 = inlined_call_operand.<no memory space> [shape: f32[1,1], index: 8, kind: input, shape index: {}]
  %s9 = inlined_call_operand.hbm [shape: f32[1,128], index: 9, kind: output, shape index: {}]
  %s10 = sld [smem:[#allocation0]]
  $region46: #{tpu_custom_call.1} parent=0
    _
  %s12 = ssub.s32 1, %s10
  %s13 = scalar_select 0, %s12, %s10
  %v14 = vstv %s8
  %15 = vst [vmem:[#allocation2] sm:$0x1] %v14
  $region1: #{tpu_custom_call.1} parent=0
    #allocation3 [shape = 'u8[512]{0}', space=vmem, size = 0x400, scoped, tag = 'output window, operand 0, single buffered']
    #allocation4 [shape = 's32[1]{0}', space=sflag, size = 0x4, scoped, tag = 'scoped memory for tpu_custom_call.1']
    %16 = vsyncpa [#allocation4], 0
    // Predicated region
    $region2: #{tpu_custom_call.1} parent=1 // pred_check
      _
    $region3: #{tpu_custom_call.1} parent=1 // pred_check_branch
      %18 = sbr.rel (0) target = $region5
    $region4: #{tpu_custom_call.1} parent=1 // pred_region
      _
    $region5: #{tpu_custom_call.1} parent=1 // pred_fallthru
      _
    // Predicated region
    $region6: #{tpu_custom_call.1} parent=1 // pred_check
      _
    $region7: #{tpu_custom_call.1} parent=1 // pred_check_branch
      %20 = sbr.rel (0) target = $region9
    $region8: #{tpu_custom_call.1} parent=1 // pred_region
      _
    $region9: #{tpu_custom_call.1} parent=1 // pred_fallthru
      _
    // Predicated region
    $region10: #{tpu_custom_call.1} parent=1 // pred_check
      _
    $region11: #{tpu_custom_call.1} parent=1 // pred_check_branch
      %22 = sbr.rel (0) target = $region13
    $region12: #{tpu_custom_call.1} parent=1 // pred_region
      _
    $region13: #{tpu_custom_call.1} parent=1 // pred_fallthru
      _
    // Predicated region
    $region14: #{tpu_custom_call.1} parent=1 // pred_check
      _
    $region15: #{tpu_custom_call.1} parent=1 // pred_check_branch
      %24 = sbr.rel (0) target = $region17
    $region16: #{tpu_custom_call.1} parent=1 // pred_region
      _
    $region17: #{tpu_custom_call.1} parent=1 // pred_fallthru
      _
    // Predicated region
    $region18: #{tpu_custom_call.1} parent=1 // pred_check
      _
    $region19: #{tpu_custom_call.1} parent=1 // pred_check_branch
      %26 = sbr.rel (0) target = $region21
    $region20: #{tpu_custom_call.1} parent=1 // pred_region
      _
    $region21: #{tpu_custom_call.1} parent=1 // pred_fallthru
      _
    // Predicated region
    $region22: #{tpu_custom_call.1} parent=1 // pred_check
      _
    $region23: #{tpu_custom_call.1} parent=1 // pred_check_branch
      %28 = sbr.rel (0) target = $region25
    $region24: #{tpu_custom_call.1} parent=1 // pred_region
      _
    $region25: #{tpu_custom_call.1} parent=1 // pred_fallthru
      _
    // Predicated region
    $region26: #{tpu_custom_call.1} parent=1 // pred_check
      _
    $region27: #{tpu_custom_call.1} parent=1 // pred_check_branch
      %30 = sbr.rel (0) target = $region29
    $region28: #{tpu_custom_call.1} parent=1 // pred_region
      _
    $region29: #{tpu_custom_call.1} parent=1 // pred_fallthru
      _
    // Predicated region
    $region30: #{tpu_custom_call.1} parent=1 // pred_check
      _
    $region31: #{tpu_custom_call.1} parent=1 // pred_check_branch
      %32 = sbr.rel (0) target = $region33
    $region32: #{tpu_custom_call.1} parent=1 // pred_region
      _
    $region33: #{tpu_custom_call.1} parent=1 // pred_fallthru
      _
    // Predicated region
    $region34: #{tpu_custom_call.1} parent=1 // pred_check
      _
    $region35: #{tpu_custom_call.1} parent=1 // pred_check_branch
      %34 = sbr.rel (0) target = $region37
    $region36: #{tpu_custom_call.1} parent=1 // pred_region
      _
    $region37: #{tpu_custom_call.1} parent=1 // pred_fallthru
      _
    %v35 = vld [vmem:[%s0] sm:$0x3]
    %v36 = vld [vmem:[%s1] sm:$0xff]
    %v37 = vld [vmem:[%s1 + $0x8] sm:$0xff]
    %v38 = vld [vmem:[%s1 + $0x10] sm:$0xff]
    %v39 = vld [vmem:[%s1 + $0x18] sm:$0xff]
    %v40 = vld [vmem:[%s2] sm:$0xff]
    %v41 = vld [vmem:[%s2 + $0x8] sm:$0xff]
    %v42 = vld [vmem:[%s2 + $0x10] sm:$0xff]
    %v43 = vld [vmem:[%s2 + $0x18] sm:$0xff]
    %45 = vset.pattern.permute.xlu0 0
    %46 = vperm.xlu0 %45, %v40
    %v47 = vpop.permute.xlu0 %46
    %50 = vset.pattern.permute.xlu0 0
    %51 = vperm.xlu0 %50, %v41
    %v52 = vpop.permute.xlu0 %51
    %55 = vset.pattern.permute.xlu0 0
    %56 = vperm.xlu0 %55, %v42
    %v57 = vpop.permute.xlu0 %56
    %60 = vset.pattern.permute.xlu0 0
    %61 = vperm.xlu0 %60, %v43
    %v62 = vpop.permute.xlu0 %61
    %vm64 = vcmask 15360
    %v66 = vsel %vm64, %v36, 0
    %v69 = vsel %vm64, %v37, 0
    %v72 = vsel %vm64, %v38, 0
    %v75 = vsel %vm64, %v39, 0
    %vm77 = vcmask 1041408
    %v79 = vsel %vm77, %v35, 0
    %81 = vmatprep.subr.mxu0 0.0
    %82 = vmatpush1.msra.mxu0 %v79
    %83 = vmatprep.subr.mxu0 0.0
    %84 = vmatpush1.msra.mxu0 0.0
    %85 = vmatprep.subr.mxu0 0.0
    %86 = vmatpush1.msra.mxu0 0.0
    %87 = vmatprep.subr.mxu0 0.0
    %88 = vmatpush1.msra.mxu0 0.0
    %89 = vmatprep.subr.mxu0 0.0
    %90 = vmatpush1.msra.mxu0 0.0
    %91 = vmatprep.subr.mxu0 0.0
    %92 = vmatpush1.msra.mxu0 0.0
    %93 = vmatprep.subr.mxu0 0.0
    %94 = vmatpush1.msra.mxu0 0.0
    %95 = vmatprep.subr.mxu0 0.0
    %96 = vmatpush1.msra.mxu0 0.0
    %97 = vmatprep.subr.mxu0 0.0
    %98 = vmatpush1.msra.mxu0 0.0
    %99 = vmatprep.subr.mxu0 0.0
    %100 = vmatpush1.msra.mxu0 0.0
    %101 = vmatprep.subr.mxu0 0.0
    %102 = vmatpush1.msra.mxu0 0.0
    %103 = vmatprep.subr.mxu0 0.0
    %104 = vmatpush1.msra.mxu0 0.0
    %105 = vmatprep.subr.mxu0 0.0
    %106 = vmatpush1.msra.mxu0 0.0
    %107 = vmatprep.subr.mxu0 0.0
    %108 = vmatpush1.msra.mxu0 0.0
    %109 = vmatprep.subr.mxu0 0.0
    %110 = vmatpush1.msra.mxu0 0.0
    %111 = vmatprep.subr.mxu0 0.0
    %112 = vmatpush1.msra.mxu0 0.0
    %113 = vmatprep.subr.mxu0 0.0
    %114 = vmatpush1.msra.mxu0 0.0
    %115 = vmatprep.subr.mxu0 0.0
    %116 = vmatpush1.msra.mxu0 0.0
    %117 = vmatprep.subr.mxu0 0.0
    %118 = vmatpush1.msra.mxu0 0.0
    %119 = vmatprep.subr.mxu0 0.0
    %120 = vmatpush1.msra.mxu0 0.0
    %121 = vmatprep.subr.mxu0 0.0
    %122 = vmatpush1.msra.mxu0 0.0
    %123 = vmatprep.subr.mxu0 0.0
    %124 = vmatpush1.msra.mxu0 0.0
    %125 = vmatprep.subr.mxu0 0.0
    %126 = vmatpush1.msra.mxu0 0.0
    %127 = vmatprep.subr.mxu0 0.0
    %128 = vmatpush1.msra.mxu0 0.0
    %129 = vmatprep.subr.mxu0 0.0
    %130 = vmatpush1.msra.mxu0 0.0
    %131 = vmatprep.subr.mxu0 0.0
    %132 = vmatpush1.msra.mxu0 0.0
    %133 = vmatprep.subr.mxu0 0.0
    %134 = vmatpush1.msra.mxu0 0.0
    %135 = vmatprep.subr.mxu0 0.0
    %136 = vmatpush1.msra.mxu0 0.0
    %137 = vmatprep.subr.mxu0 0.0
    %138 = vmatpush1.msra.mxu0 0.0
    %139 = vmatprep.subr.mxu0 0.0
    %140 = vmatpush1.msra.mxu0 0.0
    %141 = vmatprep.subr.mxu0 0.0
    %142 = vmatpush1.msra.mxu0 0.0
    %143 = vmatprep.subr.mxu0 0.0
    %144 = vmatpush1.msra.mxu0 0.0
    %145 = vmatprep.mubr.f32.mxu0 0.0
    %146 = vmatmul.mubr.f32.gmra.mrb[0].mxu0 %v66
    %v147 = vpop.f32.mrb[0].mxu0
    %v148 = vadd.f32 %v47, %v147
    %v149 = vpop.f32.mrb[0].mxu0
    %150 = vmatprep.mubr.f32.mxu0 0.0
    %151 = vmatmul.mubr.f32.gmra.mrb[0].mxu0 %v69
    %v152 = vpop.f32.mrb[0].mxu0
    %v153 = vadd.f32 %v52, %v152
    %v154 = vpop.f32.mrb[0].mxu0
    %155 = vmatprep.mubr.f32.mxu0 0.0
    %156 = vmatmul.mubr.f32.gmra.mrb[0].mxu0 %v72
    %v157 = vpop.f32.mrb[0].mxu0
    %v158 = vadd.f32 %v57, %v157
    %v159 = vpop.f32.mrb[0].mxu0
    %160 = vmatprep.mubr.f32.mxu0 0.0
    %161 = vmatmul.mubr.f32.gmra.mrb[0].mxu0 %v75
    %v162 = vpop.f32.mrb[0].mxu0
    %v163 = vadd.f32 %v62, %v162
    %v164 = vpop.f32.mrb[0].mxu0
    %165 = vdwg.mxu0
    %v166 = vtanh.pop %v148
    %v167 = vtanh.pop %v153
    %v168 = vtanh.pop %v158
    %v169 = vtanh.pop %v163
    %v170 = vld [vmem:[%s3] sm:$0xff]
    %v171 = vld [vmem:[%s3 + $0x8] sm:$0xff]
    %v172 = vld [vmem:[%s3 + $0x10] sm:$0xff]
    %v173 = vld [vmem:[%s3 + $0x18] sm:$0xff]
    %v174 = vld [vmem:[%s4] sm:$0xff]
    %v175 = vld [vmem:[%s4 + $0x8] sm:$0xff]
    %v176 = vld [vmem:[%s4 + $0x10] sm:$0xff]
    %v177 = vld [vmem:[%s4 + $0x18] sm:$0xff]
    %179 = vset.pattern.permute.xlu0 0
    %180 = vperm.xlu0 %179, %v174
    %v181 = vpop.permute.xlu0 %180
    %184 = vset.pattern.permute.xlu0 0
    %185 = vperm.xlu0 %184, %v175
    %v186 = vpop.permute.xlu0 %185
    %189 = vset.pattern.permute.xlu0 0
    %190 = vperm.xlu0 %189, %v176
    %v191 = vpop.permute.xlu0 %190
    %194 = vset.pattern.permute.xlu0 0
    %195 = vperm.xlu0 %194, %v177
    %v196 = vpop.permute.xlu0 %195
    %vm198 = vcmask 261120
    %v200 = vsel %vm198, %v170, 0
    %v203 = vsel %vm198, %v171, 0
    %v206 = vsel %vm198, %v172, 0
    %v209 = vsel %vm198, %v173, 0
    %211 = vmatprep.subr.mxu0 0.0
    %212 = vmatpush1.msra.mxu0 %v166
    %213 = vmatprep.subr.mxu0 0.0
    %214 = vmatpush1.msra.mxu0 %v167
    %215 = vmatprep.subr.mxu0 0.0
    %216 = vmatpush1.msra.mxu0 %v168
    %217 = vmatprep.subr.mxu0 0.0
    %218 = vmatpush1.msra.mxu0 %v169
    %219 = vmatprep.subr.mxu0 0.0
    %220 = vmatpush1.msra.mxu0 0.0
    %221 = vmatprep.subr.mxu0 0.0
    %222 = vmatpush1.msra.mxu0 0.0
    %223 = vmatprep.subr.mxu0 0.0
    %224 = vmatpush1.msra.mxu0 0.0
    %225 = vmatprep.subr.mxu0 0.0
    %226 = vmatpush1.msra.mxu0 0.0
    %227 = vmatprep.subr.mxu0 0.0
    %228 = vmatpush1.msra.mxu0 0.0
    %229 = vmatprep.subr.mxu0 0.0
    %230 = vmatpush1.msra.mxu0 0.0
    %231 = vmatprep.subr.mxu0 0.0
    %232 = vmatpush1.msra.mxu0 0.0
    %233 = vmatprep.subr.mxu0 0.0
    %234 = vmatpush1.msra.mxu0 0.0
    %235 = vmatprep.subr.mxu0 0.0
    %236 = vmatpush1.msra.mxu0 0.0
    %237 = vmatprep.subr.mxu0 0.0
    %238 = vmatpush1.msra.mxu0 0.0
    %239 = vmatprep.subr.mxu0 0.0
    %240 = vmatpush1.msra.mxu0 0.0
    %241 = vmatprep.subr.mxu0 0.0
    %242 = vmatpush1.msra.mxu0 0.0
    %243 = vmatprep.subr.mxu0 0.0
    %244 = vmatpush1.msra.mxu0 0.0
    %245 = vmatprep.subr.mxu0 0.0
    %246 = vmatpush1.msra.mxu0 0.0
    %247 = vmatprep.subr.mxu0 0.0
    %248 = vmatpush1.msra.mxu0 0.0
    %249 = vmatprep.subr.mxu0 0.0
    %250 = vmatpush1.msra.mxu0 0.0
    %251 = vmatprep.subr.mxu0 0.0
    %252 = vmatpush1.msra.mxu0 0.0
    %253 = vmatprep.subr.mxu0 0.0
    %254 = vmatpush1.msra.mxu0 0.0
    %255 = vmatprep.subr.mxu0 0.0
    %256 = vmatpush1.msra.mxu0 0.0
    %257 = vmatprep.subr.mxu0 0.0
    %258 = vmatpush1.msra.mxu0 0.0
    %259 = vmatprep.subr.mxu0 0.0
    %260 = vmatpush1.msra.mxu0 0.0
    %261 = vmatprep.subr.mxu0 0.0
    %262 = vmatpush1.msra.mxu0 0.0
    %263 = vmatprep.subr.mxu0 0.0
    %264 = vmatpush1.msra.mxu0 0.0
    %265 = vmatprep.subr.mxu0 0.0
    %266 = vmatpush1.msra.mxu0 0.0
    %267 = vmatprep.subr.mxu0 0.0
    %268 = vmatpush1.msra.mxu0 0.0
    %269 = vmatprep.subr.mxu0 0.0
    %270 = vmatpush1.msra.mxu0 0.0
    %271 = vmatprep.subr.mxu0 0.0
    %272 = vmatpush1.msra.mxu0 0.0
    %273 = vmatprep.subr.mxu0 0.0
    %274 = vmatpush1.msra.mxu0 0.0
    %275 = vmatprep.mubr.f32.mxu0 0.0
    %276 = vmatmul.mubr.f32.gmra.mrb[0].mxu0 %v200
    %v277 = vpop.f32.mrb[0].mxu0
    %v278 = vadd.f32 %v181, %v277
    %v279 = vpop.f32.mrb[0].mxu0
    %280 = vmatprep.mubr.f32.mxu0 0.0
    %281 = vmatmul.mubr.f32.gmra.mrb[0].mxu0 %v203
    %v282 = vpop.f32.mrb[0].mxu0
    %v283 = vadd.f32 %v186, %v282
    %v284 = vpop.f32.mrb[0].mxu0
    %285 = vmatprep.mubr.f32.mxu0 0.0
    %286 = vmatmul.mubr.f32.gmra.mrb[0].mxu0 %v206
    %v287 = vpop.f32.mrb[0].mxu0
    %v288 = vadd.f32 %v191, %v287
    %v289 = vpop.f32.mrb[0].mxu0
    %290 = vmatprep.mubr.f32.mxu0 0.0
    %291 = vmatmul.mubr.f32.gmra.mrb[0].mxu0 %v209
    %v292 = vpop.f32.mrb[0].mxu0
    %v293 = vadd.f32 %v196, %v292
    %v294 = vpop.f32.mrb[0].mxu0
    %295 = vdwg.mxu0
    %v296 = vtanh.pop %v278
    %v297 = vtanh.pop %v283
    %v298 = vtanh.pop %v288
    %v299 = vtanh.pop %v293
    %v300 = vld [vmem:[%s5] sm:$0xff]
    %v301 = vld [vmem:[%s5 + $0x8] sm:$0xff]
    %v302 = vld [vmem:[%s5 + $0x10] sm:$0xff]
    %v303 = vld [vmem:[%s5 + $0x18] sm:$0xff]
    %v304 = vld [vmem:[%s6] sm:$0xff]
    %v305 = vld [vmem:[%s6 + $0x8] sm:$0xff]
    %v306 = vld [vmem:[%s6 + $0x10] sm:$0xff]
    %v307 = vld [vmem:[%s6 + $0x18] sm:$0xff]
    %309 = vset.pattern.permute.xlu0 0
    %310 = vperm.xlu0 %309, %v304
    %v311 = vpop.permute.xlu0 %310
    %314 = vset.pattern.permute.xlu0 0
    %315 = vperm.xlu0 %314, %v305
    %v316 = vpop.permute.xlu0 %315
    %319 = vset.pattern.permute.xlu0 0
    %320 = vperm.xlu0 %319, %v306
    %v321 = vpop.permute.xlu0 %320
    %324 = vset.pattern.permute.xlu0 0
    %325 = vperm.xlu0 %324, %v307
    %v326 = vpop.permute.xlu0 %325
    %v329 = vsel %vm198, %v300, 0
    %v332 = vsel %vm198, %v301, 0
    %v335 = vsel %vm198, %v302, 0
    %v338 = vsel %vm198, %v303, 0
    %340 = vmatprep.subr.mxu0 0.0
    %341 = vmatpush1.msra.mxu0 %v296
    %342 = vmatprep.subr.mxu0 0.0
    %343 = vmatpush1.msra.mxu0 %v297
    %344 = vmatprep.subr.mxu0 0.0
    %345 = vmatpush1.msra.mxu0 %v298
    %346 = vmatprep.subr.mxu0 0.0
    %347 = vmatpush1.msra.mxu0 %v299
    %348 = vmatprep.subr.mxu0 0.0
    %349 = vmatpush1.msra.mxu0 0.0
    %350 = vmatprep.subr.mxu0 0.0
    %351 = vmatpush1.msra.mxu0 0.0
    %352 = vmatprep.subr.mxu0 0.0
    %353 = vmatpush1.msra.mxu0 0.0
    %354 = vmatprep.subr.mxu0 0.0
    %355 = vmatpush1.msra.mxu0 0.0
    %356 = vmatprep.subr.mxu0 0.0
    %357 = vmatpush1.msra.mxu0 0.0
    %358 = vmatprep.subr.mxu0 0.0
    %359 = vmatpush1.msra.mxu0 0.0
    %360 = vmatprep.subr.mxu0 0.0
    %361 = vmatpush1.msra.mxu0 0.0
    %362 = vmatprep.subr.mxu0 0.0
    %363 = vmatpush1.msra.mxu0 0.0
    %364 = vmatprep.subr.mxu0 0.0
    %365 = vmatpush1.msra.mxu0 0.0
    %366 = vmatprep.subr.mxu0 0.0
    %367 = vmatpush1.msra.mxu0 0.0
    %368 = vmatprep.subr.mxu0 0.0
    %369 = vmatpush1.msra.mxu0 0.0
    %370 = vmatprep.subr.mxu0 0.0
    %371 = vmatpush1.msra.mxu0 0.0
    %372 = vmatprep.subr.mxu0 0.0
    %373 = vmatpush1.msra.mxu0 0.0
    %374 = vmatprep.subr.mxu0 0.0
    %375 = vmatpush1.msra.mxu0 0.0
    %376 = vmatprep.subr.mxu0 0.0
    %377 = vmatpush1.msra.mxu0 0.0
    %378 = vmatprep.subr.mxu0 0.0
    %379 = vmatpush1.msra.mxu0 0.0
    %380 = vmatprep.subr.mxu0 0.0
    %381 = vmatpush1.msra.mxu0 0.0
    %382 = vmatprep.subr.mxu0 0.0
    %383 = vmatpush1.msra.mxu0 0.0
    %384 = vmatprep.subr.mxu0 0.0
    %385 = vmatpush1.msra.mxu0 0.0
    %386 = vmatprep.subr.mxu0 0.0
    %387 = vmatpush1.msra.mxu0 0.0
    %388 = vmatprep.subr.mxu0 0.0
    %389 = vmatpush1.msra.mxu0 0.0
    %390 = vmatprep.subr.mxu0 0.0
    %391 = vmatpush1.msra.mxu0 0.0
    %392 = vmatprep.subr.mxu0 0.0
    %393 = vmatpush1.msra.mxu0 0.0
    %394 = vmatprep.subr.mxu0 0.0
    %395 = vmatpush1.msra.mxu0 0.0
    %396 = vmatprep.subr.mxu0 0.0
    %397 = vmatpush1.msra.mxu0 0.0
    %398 = vmatprep.subr.mxu0 0.0
    %399 = vmatpush1.msra.mxu0 0.0
    %400 = vmatprep.subr.mxu0 0.0
    %401 = vmatpush1.msra.mxu0 0.0
    %402 = vmatprep.subr.mxu0 0.0
    %403 = vmatpush1.msra.mxu0 0.0
    %404 = vmatprep.mubr.f32.mxu0 0.0
    %405 = vmatmul.mubr.f32.gmra.mrb[0].mxu0 %v329
    %v406 = vpop.f32.mrb[0].mxu0
    %v407 = vadd.f32 %v311, %v406
    %v408 = vpop.f32.mrb[0].mxu0
    %409 = vmatprep.mubr.f32.mxu0 0.0
    %410 = vmatmul.mubr.f32.gmra.mrb[0].mxu0 %v332
    %v411 = vpop.f32.mrb[0].mxu0
    %v412 = vadd.f32 %v316, %v411
    %v413 = vpop.f32.mrb[0].mxu0
    %414 = vmatprep.mubr.f32.mxu0 0.0
    %415 = vmatmul.mubr.f32.gmra.mrb[0].mxu0 %v335
    %v416 = vpop.f32.mrb[0].mxu0
    %v417 = vadd.f32 %v321, %v416
    %v418 = vpop.f32.mrb[0].mxu0
    %419 = vmatprep.mubr.f32.mxu0 0.0
    %420 = vmatmul.mubr.f32.gmra.mrb[0].mxu0 %v338
    %v421 = vpop.f32.mrb[0].mxu0
    %v422 = vadd.f32 %v326, %v421
    %v423 = vpop.f32.mrb[0].mxu0
    %424 = vdwg.mxu0
    %v425 = vtanh.pop %v407
    %v426 = vtanh.pop %v412
    %v427 = vtanh.pop %v417
    %v428 = vtanh.pop %v422
    %v429 = vld [vmem:[%s7] sm:$0x1]
    %v430 = vld [vmem:[#allocation2] sm:$0x1]
    %432 = vset.pattern.permute.xlu0 0
    %433 = vperm.xlu0 %432, %v430
    %v434 = vpop.permute.xlu0 %433
    %v436 = vlaneseq
    %v437 = vshrl.u32 %v436, 7
    %v438 = vsub.s32 0, %v437
    %v439 = vrot.slane %v434, %v438
    %v441 = vsel %vm198, %v429, 0
    %443 = vmatprep.subr.mxu0 0.0
    %444 = vmatpush1.msra.mxu0 %v425
    %445 = vmatprep.subr.mxu0 0.0
    %446 = vmatpush1.msra.mxu0 %v426
    %447 = vmatprep.subr.mxu0 0.0
    %448 = vmatpush1.msra.mxu0 %v427
    %449 = vmatprep.subr.mxu0 0.0
    %450 = vmatpush1.msra.mxu0 %v428
    %451 = vmatprep.subr.mxu0 0.0
    %452 = vmatpush1.msra.mxu0 0.0
    %453 = vmatprep.subr.mxu0 0.0
    %454 = vmatpush1.msra.mxu0 0.0
    %455 = vmatprep.subr.mxu0 0.0
    %456 = vmatpush1.msra.mxu0 0.0
    %457 = vmatprep.subr.mxu0 0.0
    %458 = vmatpush1.msra.mxu0 0.0
    %459 = vmatprep.subr.mxu0 0.0
    %460 = vmatpush1.msra.mxu0 0.0
    %461 = vmatprep.subr.mxu0 0.0
    %462 = vmatpush1.msra.mxu0 0.0
    %463 = vmatprep.subr.mxu0 0.0
    %464 = vmatpush1.msra.mxu0 0.0
    %465 = vmatprep.subr.mxu0 0.0
    %466 = vmatpush1.msra.mxu0 0.0
    %467 = vmatprep.subr.mxu0 0.0
    %468 = vmatpush1.msra.mxu0 0.0
    %469 = vmatprep.subr.mxu0 0.0
    %470 = vmatpush1.msra.mxu0 0.0
    %471 = vmatprep.subr.mxu0 0.0
    %472 = vmatpush1.msra.mxu0 0.0
    %473 = vmatprep.subr.mxu0 0.0
    %474 = vmatpush1.msra.mxu0 0.0
    %475 = vmatprep.subr.mxu0 0.0
    %476 = vmatpush1.msra.mxu0 0.0
    %477 = vmatprep.subr.mxu0 0.0
    %478 = vmatpush1.msra.mxu0 0.0
    %479 = vmatprep.subr.mxu0 0.0
    %480 = vmatpush1.msra.mxu0 0.0
    %481 = vmatprep.subr.mxu0 0.0
    %482 = vmatpush1.msra.mxu0 0.0
    %483 = vmatprep.subr.mxu0 0.0
    %484 = vmatpush1.msra.mxu0 0.0
    %485 = vmatprep.subr.mxu0 0.0
    %486 = vmatpush1.msra.mxu0 0.0
    %487 = vmatprep.subr.mxu0 0.0
    %488 = vmatpush1.msra.mxu0 0.0
    %489 = vmatprep.subr.mxu0 0.0
    %490 = vmatpush1.msra.mxu0 0.0
    %491 = vmatprep.subr.mxu0 0.0
    %492 = vmatpush1.msra.mxu0 0.0
    %493 = vmatprep.subr.mxu0 0.0
    %494 = vmatpush1.msra.mxu0 0.0
    %495 = vmatprep.subr.mxu0 0.0
    %496 = vmatpush1.msra.mxu0 0.0
    %497 = vmatprep.subr.mxu0 0.0
    %498 = vmatpush1.msra.mxu0 0.0
    %499 = vmatprep.subr.mxu0 0.0
    %500 = vmatpush1.msra.mxu0 0.0
    %501 = vmatprep.subr.mxu0 0.0
    %502 = vmatpush1.msra.mxu0 0.0
    %503 = vmatprep.subr.mxu0 0.0
    %504 = vmatpush1.msra.mxu0 0.0
    %505 = vmatprep.subr.mxu0 0.0
    %506 = vmatpush1.msra.mxu0 0.0
    %507 = vmatprep.mubr.f32.mxu0 0.0
    %508 = vmatmul.mubr.f32.gmra.mrb[0].mxu0 %v441
    %v509 = vpop.f32.mrb[0].mxu0
    %v510 = vadd.f32 %v439, %v509
    %v511 = vpop.f32.mrb[0].mxu0
    %512 = vdwg.mxu0
    %513 = vst [vmem:[#allocation3] sm:$0x1] %v510
    // Predicated region
    $region38: #{tpu_custom_call.1} parent=1 // pred_check
      _
    $region39: #{tpu_custom_call.1} parent=1 // pred_check_branch
      %515 = sbr.rel (0) target = $region41
    $region40: #{tpu_custom_call.1} parent=1 // pred_region
      %s517 = ssub.s32 16, 16
      %518 = vsyncadd [#allocation4], %s517
      %s520 = sshll.u32 [#allocation3], 4
      %s521 = int_to_ptr.vmem [resolvable:$true] %s520
      %523 = dma.vmem_to_hbm [thread:$0]  %s521, 16, %s9, [#allocation4]
    $region41: #{tpu_custom_call.1} parent=1 // pred_fallthru
      _
    // Predicated region
    $region42: #{tpu_custom_call.1} parent=1 // pred_check
      _
    $region43: #{tpu_custom_call.1} parent=1 // pred_check_branch
      %525 = sbr.rel (0) target = $region45
    $region44: #{tpu_custom_call.1} parent=1 // pred_region
      %526 = dma.done [#allocation4], 16
    $region45: #{tpu_custom_call.1} parent=1 // pred_fallthru
      _
    %527 = vsyncpa [#allocation4], 1

</llo_original>
